<compile_context>
chip_gen: v7x
topology: tpu7x:2x2x1
jax: 0.10.0
libtpu: 0.0.40
codegen_flags: <defaults>
</compile_context>

<pallas_src>
import jax
import jax.numpy as jnp
from jax import lax
from jax.experimental import pallas as pl
from jax.experimental.pallas import tpu as pltpu


HIDDEN = 64          # logical hidden size of the PyTorch module
HIDDEN_PAD = 128     # lane-aligned hidden size used inside the kernel
TILE_B_MAX = 1024    # batch rows processed per grid step


def soft_q_kernel(x_ref, w1_ref, b1_ref, w2_ref, b2_ref, w3_ref, b3_ref, o_ref):
    """One batch tile of q = fc3(relu(fc2(relu(fc1([state, action])))))."""
    # fc1: single K = (state_dim + action_dim) matmul (concat done in wrapper).
    h1 = jnp.dot(x_ref[...], w1_ref[...],
                 preferred_element_type=jnp.float32) + b1_ref[...]
    h1 = jnp.maximum(h1, 0.0)

    # fc2
    h2 = jnp.dot(h1, w2_ref[...],
                 preferred_element_type=jnp.float32) + b2_ref[...]
    h2 = jnp.maximum(h2, 0.0)

    # fc3 as (1, HP) . (TILE_B, HP)^T -> (1, TILE_B): lane-dense output row
    # (unmasked vector stores) instead of a (TILE_B, 1) masked-store column.
    q = lax.dot_general(w3_ref[...], h2,
                        dimension_numbers=(((1,), (1,)), ((), ())),
                        preferred_element_type=jnp.float32)
    o_ref[...] = (q + b3_ref[0, 0]).astype(o_ref.dtype)


def init_params(key, state_dim, action_dim, hidden=HIDDEN):
    """PyTorch nn.Linear default init; weights stored (in_features, out_features)."""
    in_dim = state_dim + action_dim
    ks = jax.random.split(key, 6)

    def u(k, shape, fan_in):
        bound = 1.0 / jnp.sqrt(jnp.float32(fan_in))
        return jax.random.uniform(k, shape, jnp.float32, -bound, bound)

    w1 = u(ks[0], (in_dim, hidden), in_dim)   # fc1 weight (transposed)
    b1 = u(ks[1], (1, hidden), in_dim)        # fc1 bias
    w2 = u(ks[2], (hidden, hidden), hidden)   # fc2
    b2 = u(ks[3], (1, hidden), hidden)
    w3 = u(ks[4], (hidden, 1), hidden)        # fc3
    b3 = u(ks[5], (1, 1), hidden)
    return (w1, b1, w2, b2, w3, b3)


def pack_params(params, hidden_pad=HIDDEN_PAD):
    """Zero-pad hidden 64 -> 128 (exact) and lay out fc3 weight as a row."""
    w1, b1, w2, b2, w3, b3 = params
    in_dim, h = w1.shape
    hp = max(hidden_pad, h)
    w1p = jnp.zeros((in_dim, hp), jnp.float32).at[:, :h].set(w1)
    b1p = jnp.zeros((1, hp), jnp.float32).at[:, :h].set(b1)
    w2p = jnp.zeros((hp, hp), jnp.float32).at[:h, :h].set(w2)
    b2p = jnp.zeros((1, hp), jnp.float32).at[:, :h].set(b2)
    w3p = jnp.zeros((1, hp), jnp.float32).at[:, :h].set(w3[:, 0][None, :])
    b3p = jnp.asarray(b3, jnp.float32).reshape(1, 1)
    return (w1p, b1p, w2p, b2p, w3p, b3p)


def soft_q_forward(state, action, params, *,
                   compute_dtype=jnp.float32, tile_b_max=TILE_B_MAX):
    """SoftQNetwork forward as one batch-tiled Pallas call. Returns (B, 1)."""
    B = state.shape[0]
    w1p, b1p, w2p, b2p, w3p, b3p = pack_params(params)

    # Virtual concat -> a single fc1 contraction in-kernel.
    x = jnp.concatenate([state, action], axis=1).astype(compute_dtype)
    in_dim = x.shape[1]
    hp = w1p.shape[1]

    # Matmul operands may be bf16 on v6e/v7x; biases stay f32 (added post-acc).
    w1p = w1p.astype(compute_dtype)
    w2p = w2p.astype(compute_dtype)
    w3p = w3p.astype(compute_dtype)

    tile_b = B if B <= tile_b_max else tile_b_max
    grid = (pl.cdiv(B, tile_b),)

    itemsize = jnp.dtype(compute_dtype).itemsize
    cost = pl.CostEstimate(
        flops=2 * B * (in_dim * hp + hp * hp + hp),
        transcendentals=0,
        bytes_accessed=(B * in_dim * itemsize                       # x in
                        + B * 4                                     # q out
                        + (in_dim * hp + hp * hp + hp) * itemsize   # weights
                        + (2 * hp + 1) * 4),                        # biases
    )

    out = pl.pallas_call(
        soft_q_kernel,
        out_shape=jax.ShapeDtypeStruct((1, B), jnp.float32),
        grid=grid,
        in_specs=[
            pl.BlockSpec((tile_b, in_dim), lambda i: (i, 0)),      # x batch tile
            pl.BlockSpec((in_dim, hp), lambda i: (0, 0)),          # w1 (resident)
            pl.BlockSpec((1, hp), lambda i: (0, 0)),               # b1
            pl.BlockSpec((hp, hp), lambda i: (0, 0)),              # w2
            pl.BlockSpec((1, hp), lambda i: (0, 0)),               # b2
            pl.BlockSpec((1, hp), lambda i: (0, 0)),               # w3 row
            pl.BlockSpec(memory_space=pltpu.MemorySpace.SMEM),     # b3 scalar
        ],
        out_specs=pl.BlockSpec((1, tile_b), lambda i: (0, i)),     # lane-dense
        compiler_params=pltpu.CompilerParams(
            dimension_semantics=("parallel",),
            vmem_limit_bytes=32 * 1024 * 1024,
        ),
        cost_estimate=cost,
    )(x, w1p, b1p, w2p, b2p, w3p, b3p)

    return out.reshape(B, 1)


def reference_forward(state, action, params):
    w1, b1, w2, b2, w3, b3 = params
    x = jnp.concatenate([state, action], axis=1)
    h1 = jnp.maximum(x @ w1 + b1, 0.0)
    h2 = jnp.maximum(h1 @ w2 + b2, 0.0)
    return h2 @ w3 + b3


if __name__ == "__main__":
    key = jax.random.PRNGKey(0)
    k_param, k_state, k_action = jax.random.split(key, 3)

    batch, state_dim, action_dim = 8, 24, 8

    params = init_params(k_param, state_dim, action_dim)
    state = jax.random.normal(k_state, (batch, state_dim), jnp.float32)
    action = jax.random.normal(k_action, (batch, action_dim), jnp.float32)

    fwd = jax.jit(soft_q_forward)
    out = jax.block_until_ready(fwd(state, action, params))

    ref = reference_forward(state, action, params)
    assert out.shape == (batch, 1)
    assert jnp.allclose(out, ref, atol=1e-5, rtol=1e-5)

    print("KERNEL_OK")
</pallas_src>

<mosaic_0001>
module attributes {stable_mosaic.version = 11 : i64} {
  func.func @soft_q_kernel(%arg0: i32, %arg1: memref<8x32xf32, #tpu.memory_space<vmem>>, %arg2: memref<32x128xf32, #tpu.memory_space<vmem>>, %arg3: memref<1x128xf32, #tpu.memory_space<vmem>>, %arg4: memref<128x128xf32, #tpu.memory_space<vmem>>, %arg5: memref<1x128xf32, #tpu.memory_space<vmem>>, %arg6: memref<1x128xf32, #tpu.memory_space<vmem>>, %arg7: memref<1x1xf32, #tpu.memory_space<smem>>, %arg8: memref<1x8xf32, #tpu.memory_space<vmem>>) attributes {dimension_semantics = [#tpu.dimension_semantics<parallel>], iteration_bounds = array<i64: 1>, scalar_prefetch = 0 : i64, scratch_operands = 0 : i64, tpu.core_type = #tpu.core_type<tc>, window_params = [{transform_indices = @transform_0, window_bounds = array<i64: 8, 32>}, {pipeline_mode = #tpu.pipeline_mode<synchronous>, transform_indices = @transform_1, window_bounds = array<i64: 32, 128>}, {pipeline_mode = #tpu.pipeline_mode<synchronous>, transform_indices = @transform_2, window_bounds = array<i64: 1, 128>}, {pipeline_mode = #tpu.pipeline_mode<synchronous>, transform_indices = @transform_3, window_bounds = array<i64: 128, 128>}, {pipeline_mode = #tpu.pipeline_mode<synchronous>, transform_indices = @transform_4, window_bounds = array<i64: 1, 128>}, {pipeline_mode = #tpu.pipeline_mode<synchronous>, transform_indices = @transform_5, window_bounds = array<i64: 1, 128>}, {transform_indices = @transform_6, window_bounds = array<i64: 1, 1>}, {transform_indices = @transform_7, window_bounds = array<i64: 1, 8>}]} {
    %c0 = arith.constant 0 : index
    %c0_0 = arith.constant 0 : index
    %0 = vector.load %arg1[%c0, %c0_0] : memref<8x32xf32, #tpu.memory_space<vmem>>, vector<8x32xf32>
    %c0_1 = arith.constant 0 : index
    %c0_2 = arith.constant 0 : index
    %1 = vector.load %arg2[%c0_1, %c0_2] : memref<32x128xf32, #tpu.memory_space<vmem>>, vector<32x128xf32>
    %cst = arith.constant dense<0.000000e+00> : vector<8x128xf32>
    %2 = tpu.matmul %0, %1, %cst {dimension_numbers = #tpu.dot_dimension_numbers<[1], [0], [0], [1], [0, 0, 1, 1], [], []>} : vector<8x32xf32>, vector<32x128xf32>, vector<8x128xf32> -> vector<8x128xf32>
    %c0_3 = arith.constant 0 : index
    %c0_4 = arith.constant 0 : index
    %3 = vector.load %arg3[%c0_3, %c0_4] : memref<1x128xf32, #tpu.memory_space<vmem>>, vector<1x128xf32>
    %4 = vector.broadcast %3 : vector<1x128xf32> to vector<8x128xf32>
    %5 = arith.addf %2, %4 : vector<8x128xf32>
    %cst_5 = arith.constant 0.000000e+00 : f32
    %6 = vector.broadcast %cst_5 : f32 to vector<8x128xf32>
    %7 = arith.maximumf %5, %6 : vector<8x128xf32>
    %c0_6 = arith.constant 0 : index
    %c0_7 = arith.constant 0 : index
    %8 = vector.load %arg4[%c0_6, %c0_7] : memref<128x128xf32, #tpu.memory_space<vmem>>, vector<128x128xf32>
    %cst_8 = arith.constant dense<0.000000e+00> : vector<8x128xf32>
    %9 = tpu.matmul %7, %8, %cst_8 {dimension_numbers = #tpu.dot_dimension_numbers<[1], [0], [0], [1], [0, 0, 1, 1], [], []>} : vector<8x128xf32>, vector<128x128xf32>, vector<8x128xf32> -> vector<8x128xf32>
    %c0_9 = arith.constant 0 : index
    %c0_10 = arith.constant 0 : index
    %10 = vector.load %arg5[%c0_9, %c0_10] : memref<1x128xf32, #tpu.memory_space<vmem>>, vector<1x128xf32>
    %11 = vector.broadcast %10 : vector<1x128xf32> to vector<8x128xf32>
    %12 = arith.addf %9, %11 : vector<8x128xf32>
    %cst_11 = arith.constant 0.000000e+00 : f32
    %13 = vector.broadcast %cst_11 : f32 to vector<8x128xf32>
    %14 = arith.maximumf %12, %13 : vector<8x128xf32>
    %c0_12 = arith.constant 0 : index
    %c0_13 = arith.constant 0 : index
    %15 = vector.load %arg6[%c0_12, %c0_13] : memref<1x128xf32, #tpu.memory_space<vmem>>, vector<1x128xf32>
    %cst_14 = arith.constant dense<0.000000e+00> : vector<1x8xf32>
    %16 = tpu.matmul %15, %14, %cst_14 {dimension_numbers = #tpu.dot_dimension_numbers<[1], [1], [0], [0], [0, 0, 1, 0], [], []>} : vector<1x128xf32>, vector<8x128xf32>, vector<1x8xf32> -> vector<1x8xf32>
    %c0_15 = arith.constant 0 : index
    %c0_16 = arith.constant 0 : index
    %17 = memref.load %arg7[%c0_15, %c0_16] : memref<1x1xf32, #tpu.memory_space<smem>>
    %18 = vector.broadcast %17 : f32 to vector<1x8xf32>
    %19 = arith.addf %16, %18 : vector<1x8xf32>
    %c0_17 = arith.constant 0 : index
    %c0_18 = arith.constant 0 : index
    %20 = vector.load %arg8[%c0_17, %c0_18] : memref<1x8xf32, #tpu.memory_space<vmem>>, vector<1x8xf32>
    tpu.vector_store %arg8[%c0_17, %c0_18], %19 {strides = array<i32>} : memref<1x8xf32, #tpu.memory_space<vmem>>, vector<1x8xf32>,
    return
  }
  func.func @transform_0(%arg0: i32) -> (i32, i32) {
    %c0_i32 = arith.constant 0 : i32
    %c0_i32_0 = arith.constant 0 : i32
    return %arg0, %c0_i32 : i32, i32
  }
  func.func @transform_1(%arg0: i32) -> (i32, i32) {
    %c0_i32 = arith.constant 0 : i32
    %c0_i32_0 = arith.constant 0 : i32
    %c0_i32_1 = arith.constant 0 : i32
    return %c0_i32, %c0_i32_0 : i32, i32
  }
  func.func @transform_2(%arg0: i32) -> (i32, i32) {
    %c0_i32 = arith.constant 0 : i32
    %c0_i32_0 = arith.constant 0 : i32
    %c0_i32_1 = arith.constant 0 : i32
    return %c0_i32, %c0_i32_0 : i32, i32
  }
  func.func @transform_3(%arg0: i32) -> (i32, i32) {
    %c0_i32 = arith.constant 0 : i32
    %c0_i32_0 = arith.constant 0 : i32
    %c0_i32_1 = arith.constant 0 : i32
    return %c0_i32, %c0_i32_0 : i32, i32
  }
  func.func @transform_4(%arg0: i32) -> (i32, i32) {
    %c0_i32 = arith.constant 0 : i32
    %c0_i32_0 = arith.constant 0 : i32
    %c0_i32_1 = arith.constant 0 : i32
    return %c0_i32, %c0_i32_0 : i32, i32
  }
  func.func @transform_5(%arg0: i32) -> (i32, i32) {
    %c0_i32 = arith.constant 0 : i32
    %c0_i32_0 = arith.constant 0 : i32
    %c0_i32_1 = arith.constant 0 : i32
    return %c0_i32, %c0_i32_0 : i32, i32
  }
  func.func @transform_6(%arg0: i32) -> (i32, i32) {
    %c0_i32 = arith.constant 0 : i32
    %c0_i32_0 = arith.constant 0 : i32
    %c0_i32_1 = arith.constant 0 : i32
    return %c0_i32, %c0_i32_0 : i32, i32
  }
  func.func @transform_7(%arg0: i32) -> (i32, i32) {
    %c0_i32 = arith.constant 0 : i32
    %c0_i32_0 = arith.constant 0 : i32
    return %c0_i32, %arg0 : i32, i32
  }
}

</mosaic_0001>

<llo_original>
// kernel: soft_q_forward.1
$region0: #{soft_q_forward.1}
  #allocation0 [shape = 'u32[]', space=smem, size = 0x4, offset = 0x4, fixed_abs, tag = 'smem constant byte address 0x4 - core index']
  #allocation1 [shape = 'u32[144,128]{1,0:T(1,128)}', space=vmem, size = 0x12000, scoped, tag = 'internal scratch']
  #allocation2 [shape = 'f32[1,1]{1,0:T(1,128)S(6)}', space=smem, size = 0x200, scoped, tag = 'scoped memory for soft_q_forward.1']
  %s0 = inlined_call_operand.vmem [shape: f32[8,32], index: 0, kind: input, shape index: {}]
  %s1 = inlined_call_operand.vmem [shape: f32[32,128], index: 1, kind: input, shape index: {}]
  %s2 = inlined_call_operand.vmem [shape: f32[1,128], index: 2, kind: input, shape index: {}]
  %s3 = inlined_call_operand.vmem [shape: f32[128,128], index: 3, kind: input, shape index: {}]
  %s4 = inlined_call_operand.vmem [shape: f32[1,128], index: 4, kind: input, shape index: {}]
  %s5 = inlined_call_operand.vmem [shape: f32[1,128], index: 5, kind: input, shape index: {}]
  %s6 = inlined_call_operand.<no memory space> [shape: f32[1,1], index: 6, kind: input, shape index: {}]
  %s7 = inlined_call_operand.hbm [shape: f32[1,8], index: 7, kind: output, shape index: {}]
  %s8 = sld [smem:[#allocation0]]
  $region38: #{soft_q_forward.1} parent=0
    _
  %s10 = ssub.s32 1, %s8
  %s11 = scalar_select 0, %s10, %s8
  %12 = sst [smem:[#allocation2]] %s6
  $region1: #{soft_q_forward.1} parent=0
    #allocation3 [shape = 'u8[512]{0}', space=vmem, size = 0x400, scoped, tag = 'output window, operand 0, single buffered']
    #allocation4 [shape = 's32[1]{0}', space=sflag, size = 0x4, scoped, tag = 'scoped memory for soft_q_forward.1']
    %13 = vsyncpa [#allocation4], 0
    // Predicated region
    $region2: #{soft_q_forward.1} parent=1 // pred_check
      _
    $region3: #{soft_q_forward.1} parent=1 // pred_check_branch
      %15 = sbr.rel (0) target = $region5
    $region4: #{soft_q_forward.1} parent=1 // pred_region
      _
    $region5: #{soft_q_forward.1} parent=1 // pred_fallthru
      _
    // Predicated region
    $region6: #{soft_q_forward.1} parent=1 // pred_check
      _
    $region7: #{soft_q_forward.1} parent=1 // pred_check_branch
      %17 = sbr.rel (0) target = $region9
    $region8: #{soft_q_forward.1} parent=1 // pred_region
      _
    $region9: #{soft_q_forward.1} parent=1 // pred_fallthru
      _
    // Predicated region
    $region10: #{soft_q_forward.1} parent=1 // pred_check
      _
    $region11: #{soft_q_forward.1} parent=1 // pred_check_branch
      %19 = sbr.rel (0) target = $region13
    $region12: #{soft_q_forward.1} parent=1 // pred_region
      _
    $region13: #{soft_q_forward.1} parent=1 // pred_fallthru
      _
    // Predicated region
    $region14: #{soft_q_forward.1} parent=1 // pred_check
      _
    $region15: #{soft_q_forward.1} parent=1 // pred_check_branch
      %21 = sbr.rel (0) target = $region17
    $region16: #{soft_q_forward.1} parent=1 // pred_region
      _
    $region17: #{soft_q_forward.1} parent=1 // pred_fallthru
      _
    // Predicated region
    $region18: #{soft_q_forward.1} parent=1 // pred_check
      _
    $region19: #{soft_q_forward.1} parent=1 // pred_check_branch
      %23 = sbr.rel (0) target = $region21
    $region20: #{soft_q_forward.1} parent=1 // pred_region
      _
    $region21: #{soft_q_forward.1} parent=1 // pred_fallthru
      _
    // Predicated region
    $region22: #{soft_q_forward.1} parent=1 // pred_check
      _
    $region23: #{soft_q_forward.1} parent=1 // pred_check_branch
      %25 = sbr.rel (0) target = $region25
    $region24: #{soft_q_forward.1} parent=1 // pred_region
      _
    $region25: #{soft_q_forward.1} parent=1 // pred_fallthru
      _
    // Predicated region
    $region26: #{soft_q_forward.1} parent=1 // pred_check
      _
    $region27: #{soft_q_forward.1} parent=1 // pred_check_branch
      %27 = sbr.rel (0) target = $region29
    $region28: #{soft_q_forward.1} parent=1 // pred_region
      _
    $region29: #{soft_q_forward.1} parent=1 // pred_fallthru
      _
    %v28 = vld [vmem:[%s0] sm:$0xff]
    %v29 = vld [vmem:[%s1] sm:$0xff]
    %v30 = vld [vmem:[%s1 + $0x8] sm:$0xff]
    %v31 = vld [vmem:[%s1 + $0x10] sm:$0xff]
    %v32 = vld [vmem:[%s1 + $0x18] sm:$0xff]
    %v33 = vld [vmem:[%s2] sm:$0x1]
    %v35 = vlaneseq
    %v36 = vshrl.u32 %v35, 7
    %v37 = vsub.s32 0, %v36
    %v38 = vrot.slane %v33, %v37
    %vm40 = vcmask 261120
    %v42 = vsel %vm40, %v28, 0
    %44 = vmatprep.subr.mxu0 0.0
    %45 = vmatpush1.msra.mxu0 %v29
    %46 = vmatprep.subr.mxu0 0.0
    %47 = vmatpush1.msra.mxu0 %v30
    %48 = vmatprep.subr.mxu0 0.0
    %49 = vmatpush1.msra.mxu0 %v31
    %50 = vmatprep.subr.mxu0 0.0
    %51 = vmatpush1.msra.mxu0 %v32
    %52 = vmatprep.subr.mxu0 0.0
    %53 = vmatpush1.msra.mxu0 0.0
    %54 = vmatprep.subr.mxu0 0.0
    %55 = vmatpush1.msra.mxu0 0.0
    %56 = vmatprep.subr.mxu0 0.0
    %57 = vmatpush1.msra.mxu0 0.0
    %58 = vmatprep.subr.mxu0 0.0
    %59 = vmatpush1.msra.mxu0 0.0
    %60 = vmatprep.subr.mxu0 0.0
    %61 = vmatpush1.msra.mxu0 0.0
    %62 = vmatprep.subr.mxu0 0.0
    %63 = vmatpush1.msra.mxu0 0.0
    %64 = vmatprep.subr.mxu0 0.0
    %65 = vmatpush1.msra.mxu0 0.0
    %66 = vmatprep.subr.mxu0 0.0
    %67 = vmatpush1.msra.mxu0 0.0
    %68 = vmatprep.subr.mxu0 0.0
    %69 = vmatpush1.msra.mxu0 0.0
    %70 = vmatprep.subr.mxu0 0.0
    %71 = vmatpush1.msra.mxu0 0.0
    %72 = vmatprep.subr.mxu0 0.0
    %73 = vmatpush1.msra.mxu0 0.0
    %74 = vmatprep.subr.mxu0 0.0
    %75 = vmatpush1.msra.mxu0 0.0
    %76 = vmatprep.subr.mxu0 0.0
    %77 = vmatpush1.msra.mxu0 0.0
    %78 = vmatprep.subr.mxu0 0.0
    %79 = vmatpush1.msra.mxu0 0.0
    %80 = vmatprep.subr.mxu0 0.0
    %81 = vmatpush1.msra.mxu0 0.0
    %82 = vmatprep.subr.mxu0 0.0
    %83 = vmatpush1.msra.mxu0 0.0
    %84 = vmatprep.subr.mxu0 0.0
    %85 = vmatpush1.msra.mxu0 0.0
    %86 = vmatprep.subr.mxu0 0.0
    %87 = vmatpush1.msra.mxu0 0.0
    %88 = vmatprep.subr.mxu0 0.0
    %89 = vmatpush1.msra.mxu0 0.0
    %90 = vmatprep.subr.mxu0 0.0
    %91 = vmatpush1.msra.mxu0 0.0
    %92 = vmatprep.subr.mxu0 0.0
    %93 = vmatpush1.msra.mxu0 0.0
    %94 = vmatprep.subr.mxu0 0.0
    %95 = vmatpush1.msra.mxu0 0.0
    %96 = vmatprep.subr.mxu0 0.0
    %97 = vmatpush1.msra.mxu0 0.0
    %98 = vmatprep.subr.mxu0 0.0
    %99 = vmatpush1.msra.mxu0 0.0
    %100 = vmatprep.subr.mxu0 0.0
    %101 = vmatpush1.msra.mxu0 0.0
    %102 = vmatprep.subr.mxu0 0.0
    %103 = vmatpush1.msra.mxu0 0.0
    %104 = vmatprep.subr.mxu0 0.0
    %105 = vmatpush1.msra.mxu0 0.0
    %106 = vmatprep.subr.mxu0 0.0
    %107 = vmatpush1.msra.mxu0 0.0
    %108 = vmatprep.mubr.f32.mxu0 0.0
    %109 = vmatmul.mubr.f32.gmra.mrb[0].mxu0 %v42
    %v110 = vpop.f32.mrb[0].mxu0
    %v111 = vadd.f32 %v38, %v110
    %v112 = vpop.f32.mrb[0].mxu0
    %113 = vdwg.mxu0
    %v114 = vmax.f32 %v111, 0.0
    %v115 = vld [vmem:[%s3] sm:$0xff]
    %v116 = vld [vmem:[%s3 + $0x8] sm:$0xff]
    %v117 = vld [vmem:[%s3 + $0x10] sm:$0xff]
    %v118 = vld [vmem:[%s3 + $0x18] sm:$0xff]
    %v119 = vld [vmem:[%s3 + $0x20] sm:$0xff]
    %v120 = vld [vmem:[%s3 + $0x28] sm:$0xff]
    %v121 = vld [vmem:[%s3 + $0x30] sm:$0xff]
    %v122 = vld [vmem:[%s3 + $0x38] sm:$0xff]
    %v123 = vld [vmem:[%s3 + $0x40] sm:$0xff]
    %v124 = vld [vmem:[%s3 + $0x48] sm:$0xff]
    %v125 = vld [vmem:[%s3 + $0x50] sm:$0xff]
    %v126 = vld [vmem:[%s3 + $0x58] sm:$0xff]
    %v127 = vld [vmem:[%s3 + $0x60] sm:$0xff]
    %v128 = vld [vmem:[%s3 + $0x68] sm:$0xff]
    %v129 = vld [vmem:[%s3 + $0x70] sm:$0xff]
    %v130 = vld [vmem:[%s3 + $0x78] sm:$0xff]
    %v131 = vld [vmem:[%s4] sm:$0x1]
    %v133 = vlaneseq
    %v134 = vshrl.u32 %v133, 7
    %v135 = vsub.s32 0, %v134
    %v136 = vrot.slane %v131, %v135
    %138 = vmatprep.subr.mxu0 0.0
    %139 = vmatpush1.msra.mxu0 %v115
    %140 = vmatprep.subr.mxu0 0.0
    %141 = vmatpush1.msra.mxu0 %v116
    %142 = vmatprep.subr.mxu0 0.0
    %143 = vmatpush1.msra.mxu0 %v117
    %144 = vmatprep.subr.mxu0 0.0
    %145 = vmatpush1.msra.mxu0 %v118
    %146 = vmatprep.subr.mxu0 0.0
    %147 = vmatpush1.msra.mxu0 %v119
    %148 = vmatprep.subr.mxu0 0.0
    %149 = vmatpush1.msra.mxu0 %v120
    %150 = vmatprep.subr.mxu0 0.0
    %151 = vmatpush1.msra.mxu0 %v121
    %152 = vmatprep.subr.mxu0 0.0
    %153 = vmatpush1.msra.mxu0 %v122
    %154 = vmatprep.subr.mxu0 0.0
    %155 = vmatpush1.msra.mxu0 %v123
    %156 = vmatprep.subr.mxu0 0.0
    %157 = vmatpush1.msra.mxu0 %v124
    %158 = vmatprep.subr.mxu0 0.0
    %159 = vmatpush1.msra.mxu0 %v125
    %160 = vmatprep.subr.mxu0 0.0
    %161 = vmatpush1.msra.mxu0 %v126
    %162 = vmatprep.subr.mxu0 0.0
    %163 = vmatpush1.msra.mxu0 %v127
    %164 = vmatprep.subr.mxu0 0.0
    %165 = vmatpush1.msra.mxu0 %v128
    %166 = vmatprep.subr.mxu0 0.0
    %167 = vmatpush1.msra.mxu0 %v129
    %168 = vmatprep.subr.mxu0 0.0
    %169 = vmatpush1.msra.mxu0 %v130
    %170 = vmatprep.subr.mxu0 0.0
    %171 = vmatpush1.msra.mxu0 0.0
    %172 = vmatprep.subr.mxu0 0.0
    %173 = vmatpush1.msra.mxu0 0.0
    %174 = vmatprep.subr.mxu0 0.0
    %175 = vmatpush1.msra.mxu0 0.0
    %176 = vmatprep.subr.mxu0 0.0
    %177 = vmatpush1.msra.mxu0 0.0
    %178 = vmatprep.subr.mxu0 0.0
    %179 = vmatpush1.msra.mxu0 0.0
    %180 = vmatprep.subr.mxu0 0.0
    %181 = vmatpush1.msra.mxu0 0.0
    %182 = vmatprep.subr.mxu0 0.0
    %183 = vmatpush1.msra.mxu0 0.0
    %184 = vmatprep.subr.mxu0 0.0
    %185 = vmatpush1.msra.mxu0 0.0
    %186 = vmatprep.subr.mxu0 0.0
    %187 = vmatpush1.msra.mxu0 0.0
    %188 = vmatprep.subr.mxu0 0.0
    %189 = vmatpush1.msra.mxu0 0.0
    %190 = vmatprep.subr.mxu0 0.0
    %191 = vmatpush1.msra.mxu0 0.0
    %192 = vmatprep.subr.mxu0 0.0
    %193 = vmatpush1.msra.mxu0 0.0
    %194 = vmatprep.subr.mxu0 0.0
    %195 = vmatpush1.msra.mxu0 0.0
    %196 = vmatprep.subr.mxu0 0.0
    %197 = vmatpush1.msra.mxu0 0.0
    %198 = vmatprep.subr.mxu0 0.0
    %199 = vmatpush1.msra.mxu0 0.0
    %200 = vmatprep.subr.mxu0 0.0
    %201 = vmatpush1.msra.mxu0 0.0
    %202 = vmatprep.mubr.f32.mxu0 0.0
    %203 = vmatmul.mubr.f32.gmra.mrb[0].mxu0 %v114
    %v204 = vpop.f32.mrb[0].mxu0
    %v205 = vadd.f32 %v136, %v204
    %v206 = vpop.f32.mrb[0].mxu0
    %207 = vdwg.mxu0
    %v208 = vmax.f32 %v205, 0.0
    %v209 = vld [vmem:[%s5] sm:$0x1]
    %s210 = sld [smem:[#allocation2]]
    %v211 = vstv %s210
    %212 = vmatprep.subr.mxu0 0.0
    %213 = vmatpush1.xpose.msra.mxu0 %v208
    %214 = vmatprep.subr.mxu0 0.0
    %215 = vmatpush1.xpose.msra.mxu0 0.0
    %216 = vmatprep.subr.mxu0 0.0
    %217 = vmatpush1.xpose.msra.mxu0 0.0
    %218 = vmatprep.subr.mxu0 0.0
    %219 = vmatpush1.xpose.msra.mxu0 0.0
    %220 = vmatprep.subr.mxu0 0.0
    %221 = vmatpush1.xpose.msra.mxu0 0.0
    %222 = vmatprep.subr.mxu0 0.0
    %223 = vmatpush1.xpose.msra.mxu0 0.0
    %224 = vmatprep.subr.mxu0 0.0
    %225 = vmatpush1.xpose.msra.mxu0 0.0
    %226 = vmatprep.subr.mxu0 0.0
    %227 = vmatpush1.xpose.msra.mxu0 0.0
    %228 = vmatprep.subr.mxu0 0.0
    %229 = vmatpush1.xpose.msra.mxu0 0.0
    %230 = vmatprep.subr.mxu0 0.0
    %231 = vmatpush1.xpose.msra.mxu0 0.0
    %232 = vmatprep.subr.mxu0 0.0
    %233 = vmatpush1.xpose.msra.mxu0 0.0
    %234 = vmatprep.subr.mxu0 0.0
    %235 = vmatpush1.xpose.msra.mxu0 0.0
    %236 = vmatprep.subr.mxu0 0.0
    %237 = vmatpush1.xpose.msra.mxu0 0.0
    %238 = vmatprep.subr.mxu0 0.0
    %239 = vmatpush1.xpose.msra.mxu0 0.0
    %240 = vmatprep.subr.mxu0 0.0
    %241 = vmatpush1.xpose.msra.mxu0 0.0
    %242 = vmatprep.subr.mxu0 0.0
    %243 = vmatpush1.xpose.msra.mxu0 0.0
    %244 = vmatprep.subr.mxu0 0.0
    %245 = vmatpush1.xpose.msra.mxu0 0.0
    %246 = vmatprep.subr.mxu0 0.0
    %247 = vmatpush1.xpose.msra.mxu0 0.0
    %248 = vmatprep.subr.mxu0 0.0
    %249 = vmatpush1.xpose.msra.mxu0 0.0
    %250 = vmatprep.subr.mxu0 0.0
    %251 = vmatpush1.xpose.msra.mxu0 0.0
    %252 = vmatprep.subr.mxu0 0.0
    %253 = vmatpush1.xpose.msra.mxu0 0.0
    %254 = vmatprep.subr.mxu0 0.0
    %255 = vmatpush1.xpose.msra.mxu0 0.0
    %256 = vmatprep.subr.mxu0 0.0
    %257 = vmatpush1.xpose.msra.mxu0 0.0
    %258 = vmatprep.subr.mxu0 0.0
    %259 = vmatpush1.xpose.msra.mxu0 0.0
    %260 = vmatprep.subr.mxu0 0.0
    %261 = vmatpush1.xpose.msra.mxu0 0.0
    %262 = vmatprep.subr.mxu0 0.0
    %263 = vmatpush1.xpose.msra.mxu0 0.0
    %264 = vmatprep.subr.mxu0 0.0
    %265 = vmatpush1.xpose.msra.mxu0 0.0
    %266 = vmatprep.subr.mxu0 0.0
    %267 = vmatpush1.xpose.msra.mxu0 0.0
    %268 = vmatprep.subr.mxu0 0.0
    %269 = vmatpush1.xpose.msra.mxu0 0.0
    %270 = vmatprep.subr.mxu0 0.0
    %271 = vmatpush1.xpose.msra.mxu0 0.0
    %272 = vmatprep.subr.mxu0 0.0
    %273 = vmatpush1.xpose.msra.mxu0 0.0
    %274 = vmatprep.subr.mxu0 0.0
    %275 = vmatpush1.xpose.msra.mxu0 0.0
    %276 = vmatprep.mubr.f32.mxu0 0.0
    %277 = vmatmul.mubr.f32.gmra.mrb[0].mxu0 %v209
    %v278 = vpop.f32.mrb[0].mxu0
    %v279 = vadd.f32 %v211, %v278
    %v280 = vpop.f32.mrb[0].mxu0
    %281 = vdwg.mxu0
    %vm282 = vcmask 57344
    %283 = vst.msk [vmem:[#allocation3] sm:$0x1] %vm282, %v279
    // Predicated region
    $region30: #{soft_q_forward.1} parent=1 // pred_check
      _
    $region31: #{soft_q_forward.1} parent=1 // pred_check_branch
      %285 = sbr.rel (0) target = $region33
    $region32: #{soft_q_forward.1} parent=1 // pred_region
      %s287 = ssub.s32 16, 16
      %288 = vsyncadd [#allocation4], %s287
      %s290 = sshll.u32 [#allocation3], 4
      %s291 = int_to_ptr.vmem [resolvable:$true] %s290
      %293 = dma.vmem_to_hbm [thread:$0]  %s291, 16, %s7, [#allocation4]
    $region33: #{soft_q_forward.1} parent=1 // pred_fallthru
      _
    // Predicated region
    $region34: #{soft_q_forward.1} parent=1 // pred_check
      _
    $region35: #{soft_q_forward.1} parent=1 // pred_check_branch
      %295 = sbr.rel (0) target = $region37
    $region36: #{soft_q_forward.1} parent=1 // pred_region
      %296 = dma.done [#allocation4], 16
    $region37: #{soft_q_forward.1} parent=1 // pred_fallthru
      _
    %297 = vsyncpa [#allocation4], 1

</llo_original>
